<compile_context>
chip_gen: v5e
topology: v5e:2x2
jax: 0.10.0
libtpu: 0.0.40
codegen_flags: <defaults>
</compile_context>

<pallas_src>
from functools import partial

import jax
import jax.numpy as jnp
from jax.experimental import pallas as pl
from jax.experimental.pallas import tpu as pltpu

IN_FEATURES = 4
HIDDEN1 = 25
HIDDEN2 = 30
OUT_FEATURES = 3

LANE = 128   # TPU lane width: batch-tile granularity in the batch-on-lanes layout
IN_PAD = 8   # 4 -> 8   (full sublane tile for fc1)
H1_PAD = 32  # 25 -> 32
H2_PAD = 32  # 30 -> 32
OUT_PAD = 8  # 3 -> 8   (full sublane tile for the output slab)


def _cdiv(a, b):
    return -(-a // b)


def _round_up(a, m):
    return _cdiv(a, m) * m


def _choose_batch_tile(B, block_cols=2048):
    """Pick the batch tile (lane count) and padded batch size.

    - tb is a multiple of 128 (lane axis granularity).
    - Padding is bounded by ~one tile (no 2x ballooning).
    - Whenever the batch spans more than one 128-lane tile, force >= 2 grid
      steps so v7x's two TensorCores both get work under "parallel".
    """
    b_ceil = _round_up(max(B, 1), LANE)
    n_tiles = _cdiv(b_ceil, block_cols)
    if b_ceil > LANE:
        n_tiles = max(n_tiles, 2)
    tb = _round_up(_cdiv(b_ceil, n_tiles), LANE)
    n_tiles = _cdiv(b_ceil, tb)
    return tb, n_tiles * tb


def _pad2(a, rows, cols, dtype):
    a = a.astype(dtype)
    return jnp.pad(a, ((0, rows - a.shape[0]), (0, cols - a.shape[1])))


def prepare_params(params, compute_dtype=jnp.bfloat16):
    """Pack parameters ONCE (outside the per-call path) into compact,
    transposed, zero-padded tiles for the batch-on-lanes kernel.

    Weights are stored in `compute_dtype` (bf16 by default, f32 accumulation
    happens inside the kernel); biases stay f32 and are added post-dot.
    """
    w1t = _pad2(params["w1"].T, H1_PAD, IN_PAD, compute_dtype)   # (32, 8)
    w2t = _pad2(params["w2"].T, H2_PAD, H1_PAD, compute_dtype)   # (32, 32)
    w3t = _pad2(params["w3"].T, OUT_PAD, H2_PAD, compute_dtype)  # (8, 32)
    b1 = _pad2(params["b1"].T, H1_PAD, 1, jnp.float32)           # (32, 1)
    b2 = _pad2(params["b2"].T, H2_PAD, 1, jnp.float32)           # (32, 1)
    b3 = _pad2(params["b3"].T, OUT_PAD, 1, jnp.float32)          # (8, 1)
    return (w1t, b1, w2t, b2, w3t, b3)


def mlp_kernel(xt_ref, w1t_ref, b1_ref, w2t_ref, b2_ref, w3t_ref, b3_ref, o_ref):
    # xt_ref: (8, tb)  features x batch-tile (batch on lanes)
    # w*t/b* : compact VMEM-resident transposed params (constant block index)
    # o_ref : (8, tb)  logits in sublanes 0..2, zeros elsewhere
    xt = xt_ref[...]

    # fc1 + ReLU: (32,8) @ (8,tb) -> (32,tb); padded rows of w1t/b1 are zero
    # so padded sublanes of h1 stay exactly 0 and never leak into fc2.
    h1 = jnp.dot(w1t_ref[...], xt, preferred_element_type=jnp.float32)
    h1 = jnp.maximum(h1 + b1_ref[...], 0.0)

    # fc2 + ReLU: (32,32) @ (32,tb) -> (32,tb)
    h2 = jnp.dot(w2t_ref[...], h1.astype(w2t_ref.dtype),
                 preferred_element_type=jnp.float32)
    h2 = jnp.maximum(h2 + b2_ref[...], 0.0)

    # out (no activation): (8,32) @ (32,tb) -> (8,tb); rows 3..7 are zero.
    y = jnp.dot(w3t_ref[...], h2.astype(w3t_ref.dtype),
                preferred_element_type=jnp.float32)
    o_ref[...] = (y + b3_ref[...]).astype(o_ref.dtype)


@partial(jax.jit, static_argnames=("block_cols",))
def iris_net_forward(x, packed, block_cols=2048):
    """x: (B, 4) float32; packed: output of prepare_params.

    Returns (B, 3) float32 logits matching the PyTorch Net.forward.
    """
    w1t, b1, w2t, b2, w3t, b3 = packed
    cdtype = w1t.dtype
    B = x.shape[0]
    tb, b_pad = _choose_batch_tile(B, block_cols)

    # (B,4) -> pad batch to b_pad and features to 8, cast, transpose to (8, b_pad).
    # Under jit this pad+cast+transpose fuses into one small XLA op.
    xt = jnp.pad(x.astype(cdtype),
                 ((0, b_pad - B), (0, IN_PAD - IN_FEATURES))).T

    out_t = pl.pallas_call(
        mlp_kernel,
        out_shape=jax.ShapeDtypeStruct((OUT_PAD, b_pad), jnp.float32),
        grid=(b_pad // tb,),
        in_specs=[
            # x stream: batch tiled along the lane axis, pipelined/double-buffered.
            pl.BlockSpec((IN_PAD, tb), lambda i: (0, i)),
            # compact params: constant block index -> fetched once, VMEM-resident.
            pl.BlockSpec(w1t.shape, lambda i: (0, 0)),
            pl.BlockSpec(b1.shape, lambda i: (0, 0)),
            pl.BlockSpec(w2t.shape, lambda i: (0, 0)),
            pl.BlockSpec(b2.shape, lambda i: (0, 0)),
            pl.BlockSpec(w3t.shape, lambda i: (0, 0)),
            pl.BlockSpec(b3.shape, lambda i: (0, 0)),
        ],
        out_specs=pl.BlockSpec((OUT_PAD, tb), lambda i: (0, i)),
        compiler_params=pltpu.CompilerParams(
            dimension_semantics=("parallel",),
        ),
    )(xt, w1t, b1, w2t, b2, w3t, b3)

    # logits live in sublanes 0..2; padded lanes/rows are discarded here.
    return out_t[:OUT_FEATURES, :B].T


def init_params(key):
    """Deterministic init mimicking PyTorch nn.Linear default U[-1/sqrt(fan_in), 1/sqrt(fan_in)]."""
    def linear(key, fan_in, fan_out):
        kw, kb = jax.random.split(key)
        bound = 1.0 / jnp.sqrt(float(fan_in))
        # stored as (in, out) so the math is x @ W (PyTorch computes x @ W^T)
        w = jax.random.uniform(kw, (fan_in, fan_out), jnp.float32, -bound, bound)
        b = jax.random.uniform(kb, (1, fan_out), jnp.float32, -bound, bound)
        return w, b

    k1, k2, k3 = jax.random.split(key, 3)
    w1, b1 = linear(k1, IN_FEATURES, HIDDEN1)
    w2, b2 = linear(k2, HIDDEN1, HIDDEN2)
    w3, b3 = linear(k3, HIDDEN2, OUT_FEATURES)
    return {"w1": w1, "b1": b1, "w2": w2, "b2": b2, "w3": w3, "b3": b3}


if __name__ == "__main__":
    key = jax.random.PRNGKey(0)
    kx, kp = jax.random.split(key)

    B = 8  # small batch of iris-like rows (4 features each)
    x = jax.random.normal(kx, (B, IN_FEATURES), dtype=jnp.float32)
    params = init_params(kp)

    # reference in plain JAX
    ref = jnp.maximum(x @ params["w1"] + params["b1"], 0.0)
    ref = jnp.maximum(ref @ params["w2"] + params["b2"], 0.0)
    ref = ref @ params["w3"] + params["b3"]

    # Default path: bf16 operands, f32 accumulation (packed once, reused per call).
    packed_bf16 = prepare_params(params)  # compute_dtype=bf16
    out = jax.block_until_ready(iris_net_forward(x, packed_bf16))
    assert out.shape == (B, OUT_FEATURES)
    assert jnp.allclose(out, ref, atol=2e-2, rtol=2e-2)

    # Exact-f32 path (same kernel, f32 params) for tight numerical validation.
    packed_f32 = prepare_params(params, jnp.float32)
    out_f32 = jax.block_until_ready(iris_net_forward(x, packed_f32))
    assert jnp.allclose(out_f32, ref, atol=1e-5, rtol=1e-5)

    print("KERNEL_OK")
</pallas_src>

<mosaic_0001>
module attributes {stable_mosaic.version = 11 : i64} {
  func.func @mlp_kernel(%arg0: i32, %arg1: memref<8x128xbf16, #tpu.memory_space<vmem>>, %arg2: memref<32x8xbf16, #tpu.memory_space<vmem>>, %arg3: memref<32x1xf32, #tpu.memory_space<vmem>>, %arg4: memref<32x32xbf16, #tpu.memory_space<vmem>>, %arg5: memref<32x1xf32, #tpu.memory_space<vmem>>, %arg6: memref<8x32xbf16, #tpu.memory_space<vmem>>, %arg7: memref<8x1xf32, #tpu.memory_space<vmem>>, %arg8: memref<8x128xf32, #tpu.memory_space<vmem>>) attributes {dimension_semantics = [#tpu.dimension_semantics<parallel>], iteration_bounds = array<i64: 1>, scalar_prefetch = 0 : i64, scratch_operands = 0 : i64, tpu.core_type = #tpu.core_type<tc>, window_params = [{transform_indices = @transform_0, window_bounds = array<i64: 8, 128>}, {pipeline_mode = #tpu.pipeline_mode<synchronous>, transform_indices = @transform_1, window_bounds = array<i64: 32, 8>}, {pipeline_mode = #tpu.pipeline_mode<synchronous>, transform_indices = @transform_2, window_bounds = array<i64: 32, 1>}, {pipeline_mode = #tpu.pipeline_mode<synchronous>, transform_indices = @transform_3, window_bounds = array<i64: 32, 32>}, {pipeline_mode = #tpu.pipeline_mode<synchronous>, transform_indices = @transform_4, window_bounds = array<i64: 32, 1>}, {pipeline_mode = #tpu.pipeline_mode<synchronous>, transform_indices = @transform_5, window_bounds = array<i64: 8, 32>}, {pipeline_mode = #tpu.pipeline_mode<synchronous>, transform_indices = @transform_6, window_bounds = array<i64: 8, 1>}, {transform_indices = @transform_7, window_bounds = array<i64: 8, 128>}]} {
    %c0 = arith.constant 0 : index
    %c0_0 = arith.constant 0 : index
    %0 = vector.load %arg1[%c0, %c0_0] : memref<8x128xbf16, #tpu.memory_space<vmem>>, vector<8x128xbf16>
    %c0_1 = arith.constant 0 : index
    %c0_2 = arith.constant 0 : index
    %1 = vector.load %arg2[%c0_1, %c0_2] : memref<32x8xbf16, #tpu.memory_space<vmem>>, vector<32x8xbf16>
    %cst = arith.constant dense<0.000000e+00> : vector<32x128xf32>
    %2 = tpu.matmul %1, %0, %cst {dimension_numbers = #tpu.dot_dimension_numbers<[1], [0], [0], [1], [0, 0, 1, 1], [], []>} : vector<32x8xbf16>, vector<8x128xbf16>, vector<32x128xf32> -> vector<32x128xf32>
    %c0_3 = arith.constant 0 : index
    %c0_4 = arith.constant 0 : index
    %3 = vector.load %arg3[%c0_3, %c0_4] : memref<32x1xf32, #tpu.memory_space<vmem>>, vector<32x1xf32>
    %4 = vector.broadcast %3 : vector<32x1xf32> to vector<32x128xf32>
    %5 = arith.addf %2, %4 : vector<32x128xf32>
    %cst_5 = arith.constant 0.000000e+00 : f32
    %6 = vector.broadcast %cst_5 : f32 to vector<32x128xf32>
    %7 = arith.maximumf %5, %6 : vector<32x128xf32>
    %c0_6 = arith.constant 0 : index
    %c0_7 = arith.constant 0 : index
    %8 = vector.load %arg4[%c0_6, %c0_7] : memref<32x32xbf16, #tpu.memory_space<vmem>>, vector<32x32xbf16>
    %9 = arith.truncf %7 : vector<32x128xf32> to vector<32x128xbf16>
    %cst_8 = arith.constant dense<0.000000e+00> : vector<32x128xf32>
    %10 = tpu.matmul %8, %9, %cst_8 {dimension_numbers = #tpu.dot_dimension_numbers<[1], [0], [0], [1], [0, 0, 1, 1], [], []>} : vector<32x32xbf16>, vector<32x128xbf16>, vector<32x128xf32> -> vector<32x128xf32>
    %c0_9 = arith.constant 0 : index
    %c0_10 = arith.constant 0 : index
    %11 = vector.load %arg5[%c0_9, %c0_10] : memref<32x1xf32, #tpu.memory_space<vmem>>, vector<32x1xf32>
    %12 = vector.broadcast %11 : vector<32x1xf32> to vector<32x128xf32>
    %13 = arith.addf %10, %12 : vector<32x128xf32>
    %cst_11 = arith.constant 0.000000e+00 : f32
    %14 = vector.broadcast %cst_11 : f32 to vector<32x128xf32>
    %15 = arith.maximumf %13, %14 : vector<32x128xf32>
    %c0_12 = arith.constant 0 : index
    %c0_13 = arith.constant 0 : index
    %16 = vector.load %arg6[%c0_12, %c0_13] : memref<8x32xbf16, #tpu.memory_space<vmem>>, vector<8x32xbf16>
    %17 = arith.truncf %15 : vector<32x128xf32> to vector<32x128xbf16>
    %cst_14 = arith.constant dense<0.000000e+00> : vector<8x128xf32>
    %18 = tpu.matmul %16, %17, %cst_14 {dimension_numbers = #tpu.dot_dimension_numbers<[1], [0], [0], [1], [0, 0, 1, 1], [], []>} : vector<8x32xbf16>, vector<32x128xbf16>, vector<8x128xf32> -> vector<8x128xf32>
    %c0_15 = arith.constant 0 : index
    %c0_16 = arith.constant 0 : index
    %19 = vector.load %arg7[%c0_15, %c0_16] : memref<8x1xf32, #tpu.memory_space<vmem>>, vector<8x1xf32>
    %20 = vector.broadcast %19 : vector<8x1xf32> to vector<8x128xf32>
    %21 = arith.addf %18, %20 : vector<8x128xf32>
    %c0_17 = arith.constant 0 : index
    %c0_18 = arith.constant 0 : index
    %22 = vector.load %arg8[%c0_17, %c0_18] : memref<8x128xf32, #tpu.memory_space<vmem>>, vector<8x128xf32>
    tpu.vector_store %arg8[%c0_17, %c0_18], %21 {strides = array<i32>} : memref<8x128xf32, #tpu.memory_space<vmem>>, vector<8x128xf32>,
    return
  }
  func.func @transform_0(%arg0: i32) -> (i32, i32) {
    %c0_i32 = arith.constant 0 : i32
    %c0_i32_0 = arith.constant 0 : i32
    return %c0_i32, %arg0 : i32, i32
  }
  func.func @transform_1(%arg0: i32) -> (i32, i32) {
    %c0_i32 = arith.constant 0 : i32
    %c0_i32_0 = arith.constant 0 : i32
    %c0_i32_1 = arith.constant 0 : i32
    return %c0_i32, %c0_i32_0 : i32, i32
  }
  func.func @transform_2(%arg0: i32) -> (i32, i32) {
    %c0_i32 = arith.constant 0 : i32
    %c0_i32_0 = arith.constant 0 : i32
    %c0_i32_1 = arith.constant 0 : i32
    return %c0_i32, %c0_i32_0 : i32, i32
  }
  func.func @transform_3(%arg0: i32) -> (i32, i32) {
    %c0_i32 = arith.constant 0 : i32
    %c0_i32_0 = arith.constant 0 : i32
    %c0_i32_1 = arith.constant 0 : i32
    return %c0_i32, %c0_i32_0 : i32, i32
  }
  func.func @transform_4(%arg0: i32) -> (i32, i32) {
    %c0_i32 = arith.constant 0 : i32
    %c0_i32_0 = arith.constant 0 : i32
    %c0_i32_1 = arith.constant 0 : i32
    return %c0_i32, %c0_i32_0 : i32, i32
  }
  func.func @transform_5(%arg0: i32) -> (i32, i32) {
    %c0_i32 = arith.constant 0 : i32
    %c0_i32_0 = arith.constant 0 : i32
    %c0_i32_1 = arith.constant 0 : i32
    return %c0_i32, %c0_i32_0 : i32, i32
  }
  func.func @transform_6(%arg0: i32) -> (i32, i32) {
    %c0_i32 = arith.constant 0 : i32
    %c0_i32_0 = arith.constant 0 : i32
    %c0_i32_1 = arith.constant 0 : i32
    return %c0_i32, %c0_i32_0 : i32, i32
  }
  func.func @transform_7(%arg0: i32) -> (i32, i32) {
    %c0_i32 = arith.constant 0 : i32
    %c0_i32_0 = arith.constant 0 : i32
    return %c0_i32, %arg0 : i32, i32
  }
}

</mosaic_0001>

<llo_original>
// kernel: iris_net_forward.1
$region0: #{iris_net_forward.1}
  #allocation0 [shape = 'u32[]', space=smem, size = 0x4, offset = 0x4, fixed_abs, tag = 'smem constant byte address 0x4 - core index']
  #allocation1 [shape = 'u32[72,128]{1,0:T(1,128)}', space=vmem, size = 0x9000, scoped, tag = 'internal scratch']
  %s0 = inlined_call_operand.vmem [shape: bf16[8,128], index: 0, kind: input, shape index: {}]
  %s1 = inlined_call_operand.vmem [shape: bf16[32,8], index: 1, kind: input, shape index: {}]
  %s2 = inlined_call_operand.vmem [shape: f32[32,1], index: 2, kind: input, shape index: {}]
  %s3 = inlined_call_operand.vmem [shape: bf16[32,32], index: 3, kind: input, shape index: {}]
  %s4 = inlined_call_operand.vmem [shape: f32[32,1], index: 4, kind: input, shape index: {}]
  %s5 = inlined_call_operand.vmem [shape: bf16[8,32], index: 5, kind: input, shape index: {}]
  %s6 = inlined_call_operand.vmem [shape: f32[8,1], index: 6, kind: input, shape index: {}]
  %s7 = inlined_call_operand.vmem [shape: f32[8,128], index: 7, kind: output, shape index: {}]
  %s8 = sld [smem:[#allocation0]]
  $region38: #{iris_net_forward.1} parent=0
    _
  %s10 = ssub.s32 1, %s8
  %s11 = scalar_select 0, %s10, %s8
  // Predicated region
  $region2: #{iris_net_forward.1} parent=0 // pred_check
    _
  $region3: #{iris_net_forward.1} parent=0 // pred_check_branch
    %13 = sbr.rel (0) target = $region5
  $region4: #{iris_net_forward.1} parent=0 // pred_region
    _
  $region5: #{iris_net_forward.1} parent=0 // pred_fallthru
    _
  // Predicated region
  $region6: #{iris_net_forward.1} parent=0 // pred_check
    _
  $region7: #{iris_net_forward.1} parent=0 // pred_check_branch
    %15 = sbr.rel (0) target = $region9
  $region8: #{iris_net_forward.1} parent=0 // pred_region
    _
  $region9: #{iris_net_forward.1} parent=0 // pred_fallthru
    _
  // Predicated region
  $region10: #{iris_net_forward.1} parent=0 // pred_check
    _
  $region11: #{iris_net_forward.1} parent=0 // pred_check_branch
    %17 = sbr.rel (0) target = $region13
  $region12: #{iris_net_forward.1} parent=0 // pred_region
    _
  $region13: #{iris_net_forward.1} parent=0 // pred_fallthru
    _
  // Predicated region
  $region14: #{iris_net_forward.1} parent=0 // pred_check
    _
  $region15: #{iris_net_forward.1} parent=0 // pred_check_branch
    %19 = sbr.rel (0) target = $region17
  $region16: #{iris_net_forward.1} parent=0 // pred_region
    _
  $region17: #{iris_net_forward.1} parent=0 // pred_fallthru
    _
  // Predicated region
  $region18: #{iris_net_forward.1} parent=0 // pred_check
    _
  $region19: #{iris_net_forward.1} parent=0 // pred_check_branch
    %21 = sbr.rel (0) target = $region21
  $region20: #{iris_net_forward.1} parent=0 // pred_region
    _
  $region21: #{iris_net_forward.1} parent=0 // pred_fallthru
    _
  // Predicated region
  $region22: #{iris_net_forward.1} parent=0 // pred_check
    _
  $region23: #{iris_net_forward.1} parent=0 // pred_check_branch
    %23 = sbr.rel (0) target = $region25
  $region24: #{iris_net_forward.1} parent=0 // pred_region
    _
  $region25: #{iris_net_forward.1} parent=0 // pred_fallthru
    _
  // Predicated region
  $region26: #{iris_net_forward.1} parent=0 // pred_check
    _
  $region27: #{iris_net_forward.1} parent=0 // pred_check_branch
    %25 = sbr.rel (0) target = $region29
  $region28: #{iris_net_forward.1} parent=0 // pred_region
    _
  $region29: #{iris_net_forward.1} parent=0 // pred_fallthru
    _
  %v27 = vld [vmem:[%s0] sm:$0xf]
  %v28 = vld [vmem:[%s1] sm:$0xf]
  %v29 = vld [vmem:[%s1 + $0x4] sm:$0xf]
  %v30 = vld [vmem:[%s1 + $0x8] sm:$0xf]
  %v31 = vld [vmem:[%s1 + $0xc] sm:$0xf]
  %v32 = vld [vmem:[%s2] sm:$0xff]
  %v33 = vld [vmem:[%s2 + $0x8] sm:$0xff]
  %v34 = vld [vmem:[%s2 + $0x10] sm:$0xff]
  %v35 = vld [vmem:[%s2 + $0x18] sm:$0xff]
  %37 = vset.pattern.permute.xlu0 0
  %38 = vperm.xlu0 %37, %v32
  %v39 = vpop.permute.xlu0 %38
  %42 = vset.pattern.permute.xlu0 0
  %43 = vperm.xlu0 %42, %v33
  %v44 = vpop.permute.xlu0 %43
  %47 = vset.pattern.permute.xlu0 0
  %48 = vperm.xlu0 %47, %v34
  %v49 = vpop.permute.xlu0 %48
  %52 = vset.pattern.permute.xlu0 0
  %53 = vperm.xlu0 %52, %v35
  %v54 = vpop.permute.xlu0 %53
  %v60 = vunpack.c.l.b16 %v28
  %v61 = vunpack.c.l.b16 %v29
  %v62 = vunpack.c.l.b16 %v30
  %v63 = vunpack.c.l.b16 %v31
  %v64 = vpack.c.b16 %v61, %v60
  %v65 = vpack.c.b16 %v63, %v62
  %vm66 = vcmask 64512
  %v68 = vsel %vm66, %v64, 0
  %v71 = vsel %vm66, %v65, 0
  %vm73 = vcmask 1043456
  %v75 = vsel %vm73, %v27, 0
  %77 = vmatpush.bf16.msra.mxu0 0
  %78 = vmatpush.bf16.msra.mxu0 0
  %79 = vmatpush.bf16.msra.mxu0 0
  %80 = vmatpush.bf16.msra.mxu0 0
  %81 = vmatpush.bf16.msra.mxu0 0
  %82 = vmatpush.bf16.msra.mxu0 0
  %83 = vmatpush.bf16.msra.mxu0 0
  %84 = vmatpush.bf16.msra.mxu0 %v75
  %85 = vmatmul.bf16.gmra.mxu0 %v68
  %v86 = vpop.f32.mrf.mxu0
  %v87 = vadd.f32 %v39, %v86
  %v88 = vpop.f32.mrf.mxu0
  %v89 = vadd.f32 %v44, %v88
  %90 = vmatmul.bf16.gmra.mxu0 %v71
  %v91 = vpop.f32.mrf.mxu0
  %v92 = vadd.f32 %v49, %v91
  %v93 = vpop.f32.mrf.mxu0
  %v94 = vadd.f32 %v54, %v93
  %95 = vdwg.mxu0
  %v96 = vmax.f32 %v87, 0.0
  %v97 = vmax.f32 %v89, 0.0
  %v98 = vmax.f32 %v92, 0.0
  %v99 = vmax.f32 %v94, 0.0
  %v100 = vld [vmem:[%s3] sm:$0xf]
  %v101 = vld [vmem:[%s3 + $0x4] sm:$0xf]
  %v102 = vld [vmem:[%s3 + $0x8] sm:$0xf]
  %v103 = vld [vmem:[%s3 + $0xc] sm:$0xf]
  %v104 = vpack.c.bf16 %v97, %v96
  %v105 = vpack.c.bf16 %v99, %v98
  %v106 = vld [vmem:[%s4] sm:$0xff]
  %v107 = vld [vmem:[%s4 + $0x8] sm:$0xff]
  %v108 = vld [vmem:[%s4 + $0x10] sm:$0xff]
  %v109 = vld [vmem:[%s4 + $0x18] sm:$0xff]
  %111 = vset.pattern.permute.xlu0 0
  %112 = vperm.xlu0 %111, %v106
  %v113 = vpop.permute.xlu0 %112
  %116 = vset.pattern.permute.xlu0 0
  %117 = vperm.xlu0 %116, %v107
  %v118 = vpop.permute.xlu0 %117
  %121 = vset.pattern.permute.xlu0 0
  %122 = vperm.xlu0 %121, %v108
  %v123 = vpop.permute.xlu0 %122
  %126 = vset.pattern.permute.xlu0 0
  %127 = vperm.xlu0 %126, %v109
  %v128 = vpop.permute.xlu0 %127
  %v134 = vunpack.c.l.b16 %v100
  %v135 = vunpack.c.l.b16 %v101
  %v136 = vunpack.c.l.b16 %v102
  %v137 = vunpack.c.l.b16 %v103
  %v138 = vpack.c.b16 %v135, %v134
  %v139 = vpack.c.b16 %v137, %v136
  %vm140 = vcmask 261120
  %v142 = vsel %vm140, %v138, 0
  %v145 = vsel %vm140, %v139, 0
  %147 = vmatpush.bf16.msra.mxu0 0
  %148 = vmatpush.bf16.msra.mxu0 0
  %149 = vmatpush.bf16.msra.mxu0 0
  %150 = vmatpush.bf16.msra.mxu0 0
  %151 = vmatpush.bf16.msra.mxu0 0
  %152 = vmatpush.bf16.msra.mxu0 0
  %153 = vmatpush.bf16.msra.mxu0 %v105
  %154 = vmatpush.bf16.msra.mxu0 %v104
  %155 = vmatmul.bf16.gmra.mxu0 %v142
  %v156 = vpop.f32.mrf.mxu0
  %v157 = vadd.f32 %v113, %v156
  %v158 = vpop.f32.mrf.mxu0
  %v159 = vadd.f32 %v118, %v158
  %160 = vmatmul.bf16.gmra.mxu0 %v145
  %v161 = vpop.f32.mrf.mxu0
  %v162 = vadd.f32 %v123, %v161
  %v163 = vpop.f32.mrf.mxu0
  %v164 = vadd.f32 %v128, %v163
  %165 = vdwg.mxu0
  %v166 = vmax.f32 %v157, 0.0
  %v167 = vmax.f32 %v159, 0.0
  %v168 = vmax.f32 %v162, 0.0
  %v169 = vmax.f32 %v164, 0.0
  %v170 = vld [vmem:[%s5] sm:$0xf]
  %v171 = vpack.c.bf16 %v167, %v166
  %v172 = vpack.c.bf16 %v169, %v168
  %v173 = vld [vmem:[%s6] sm:$0xff]
  %175 = vset.pattern.permute.xlu0 0
  %176 = vperm.xlu0 %175, %v173
  %v177 = vpop.permute.xlu0 %176
  %v180 = vsel %vm140, %v170, 0
  %182 = vmatpush.bf16.msra.mxu0 0
  %183 = vmatpush.bf16.msra.mxu0 0
  %184 = vmatpush.bf16.msra.mxu0 0
  %185 = vmatpush.bf16.msra.mxu0 0
  %186 = vmatpush.bf16.msra.mxu0 0
  %187 = vmatpush.bf16.msra.mxu0 0
  %188 = vmatpush.bf16.msra.mxu0 %v172
  %189 = vmatpush.bf16.msra.mxu0 %v171
  %190 = vmatmul.bf16.gmra.mxu0 %v180
  %v191 = vpop.f32.mrf.mxu0
  %v192 = vadd.f32 %v177, %v191
  %v193 = vpop.f32.mrf.mxu0
  %194 = vdwg.mxu0
  %195 = vst [vmem:[%s7] sm:$0xff] %v192
  // Predicated region
  $region30: #{iris_net_forward.1} parent=0 // pred_check
    _
  $region31: #{iris_net_forward.1} parent=0 // pred_check_branch
    %197 = sbr.rel (0) target = $region33
  $region32: #{iris_net_forward.1} parent=0 // pred_region
    _
  $region33: #{iris_net_forward.1} parent=0 // pred_fallthru
    _
  // Predicated region
  $region34: #{iris_net_forward.1} parent=0 // pred_check
    _
  $region35: #{iris_net_forward.1} parent=0 // pred_check_branch
    %199 = sbr.rel (0) target = $region37
  $region36: #{iris_net_forward.1} parent=0 // pred_region
    _
  $region37: #{iris_net_forward.1} parent=0 // pred_fallthru
    _

</llo_original>
